<compile_context>
chip_gen: v5e
topology: v5e:2x2
jax: 0.10.0
libtpu: 0.0.40
codegen_flags: <defaults>
</compile_context>

<pallas_src>
import jax
import jax.numpy as jnp
from jax.experimental import pallas as pl
from jax.experimental.pallas import tpu as pltpu


def dnn_kernel(x_ref, w1_ref, b1_ref, w2_ref, b2_ref, w3_ref, b3_ref,
               q_ref, a_ref):
    """Fused 3-layer MLP + greedy action.

    bf16 MXU operands, f32 accumulation; bias-add/ReLU in f32 (v5e has no
    bf16 VPU). Q-values are written f32 in (block_b, n_action); the greedy
    action is written lane-dense as (1, block_b) int32.
    """
    # In-kernel cast: x arrives f32, MXU wants bf16 operands.
    x = x_ref[...].astype(jnp.bfloat16)

    h1 = jnp.dot(x, w1_ref[...], preferred_element_type=jnp.float32) + b1_ref[...]
    h1 = jnp.maximum(h1, 0.0).astype(jnp.bfloat16)
    h2 = jnp.dot(h1, w2_ref[...], preferred_element_type=jnp.float32) + b2_ref[...]
    h2 = jnp.maximum(h2, 0.0).astype(jnp.bfloat16)
    q = jnp.dot(h2, w3_ref[...], preferred_element_type=jnp.float32) + b3_ref[...]
    q_ref[...] = q

    # Fused greedy action: first index achieving the row max (matches
    # jnp.argmax tie-breaking). Computed as (block_b, 1), then transposed to
    # (1, block_b) so the store is lane-dense (XLU transpose; XLU is idle).
    n_act = q.shape[-1]
    col = jax.lax.broadcasted_iota(jnp.int32, q.shape, 1)
    qmax = jnp.max(q, axis=-1, keepdims=True)
    cand = jnp.where(q == qmax, col, n_act)
    a_col = jnp.min(cand, axis=-1, keepdims=True).astype(jnp.int32)  # (block_b, 1)
    a_ref[...] = a_col.T                                             # (1, block_b)


def _pick_block_b(B):
    """Batch tile size.

    The kernel is step-overhead bound (not MXU/HBM bound), so: one grid step
    for B <= 1024; 1024-2048 row tiles for bigger batches. Always a multiple
    of 16 (bf16 native (16,128) tile) or exactly B.
    """
    if B <= 1024:
        return B                   # single grid step
    if B <= 4096:
        return 1024
    return 2048


def dnn_forward(x, params, *, block_b=None):
    """Run the fused MLP.

    x: (B, n_state) float32. params: dict W1,b1,W2,b2,W3,b3 with W shaped
    (in, out) in bf16 and b shaped (1, out) in f32.
    Returns (q_values f32 (B, n_action), greedy_action i32 (B,)).
    """
    B, n_state = x.shape
    hidden = params["W1"].shape[1]
    n_action = params["W3"].shape[1]

    if block_b is None:
        block_b = _pick_block_b(B)
    block_b = min(block_b, B)
    grid = (pl.cdiv(B, block_b),)

    # Params are already stored in kernel dtypes (bf16 W, f32 b); these casts
    # are no-ops in that case and only matter if a caller hands us f32 weights.
    x32 = x.astype(jnp.float32)
    w1 = params["W1"].astype(jnp.bfloat16)
    w2 = params["W2"].astype(jnp.bfloat16)
    w3 = params["W3"].astype(jnp.bfloat16)
    b1 = params["b1"].astype(jnp.float32)
    b2 = params["b2"].astype(jnp.float32)
    b3 = params["b3"].astype(jnp.float32)

    # Constant-index specs: weights/biases stay resident, only x/q/a tiles move.
    const2d = lambda shape: pl.BlockSpec(shape, lambda i: (0, 0))

    q, act = pl.pallas_call(
        dnn_kernel,
        out_shape=(
            jax.ShapeDtypeStruct((B, n_action), jnp.float32),
            jax.ShapeDtypeStruct((1, B), jnp.int32),          # lane-dense action
        ),
        grid=grid,
        in_specs=[
            pl.BlockSpec((block_b, n_state), lambda i: (i, 0)),   # x tile (f32)
            const2d((n_state, hidden)),                           # W1
            const2d((1, hidden)),                                 # b1
            const2d((hidden, hidden)),                            # W2
            const2d((1, hidden)),                                 # b2
            const2d((hidden, n_action)),                          # W3
            const2d((1, n_action)),                               # b3
        ],
        out_specs=(
            pl.BlockSpec((block_b, n_action), lambda i: (i, 0)),  # Q-values
            pl.BlockSpec((1, block_b), lambda i: (0, i)),         # greedy action
        ),
        # TODO(synk): on v7x, try dimension_semantics=(pltpu.CORE_PARALLEL,)
        # with an even grid and confirm the 2-TC split in xprof.
        compiler_params=pltpu.CompilerParams(
            dimension_semantics=("parallel",),
        ),
    )(x32, w1, b1, w2, b2, w3, b3)
    return q, act.reshape(B)


def init_params(key, n_state, n_action, hidden=64):
    """Init mimicking nn.Linear default U[-1/sqrt(in), 1/sqrt(in)].

    Weights are stored (in, out) in bf16 (MXU-native); biases (1, out) in f32,
    so the per-call casts in dnn_forward are no-ops.
    """
    def linear(key, fan_in, fan_out):
        kw, kb = jax.random.split(key)
        bound = 1.0 / jnp.sqrt(fan_in)
        W = jax.random.uniform(kw, (fan_in, fan_out), jnp.float32, -bound, bound)
        b = jax.random.uniform(kb, (1, fan_out), jnp.float32, -bound, bound)
        return W.astype(jnp.bfloat16), b

    k1, k2, k3 = jax.random.split(key, 3)
    W1, b1 = linear(k1, n_state, hidden)
    W2, b2 = linear(k2, hidden, hidden)
    W3, b3 = linear(k3, hidden, n_action)
    return {"W1": W1, "b1": b1, "W2": W2, "b2": b2, "W3": W3, "b3": b3}


def dnn_reference_bf16(x, p):
    """Pure-JAX reference with the same bf16-operand / f32-accum recipe."""
    bf = jnp.bfloat16
    h1 = jnp.dot(x.astype(bf), p["W1"].astype(bf),
                 preferred_element_type=jnp.float32) + p["b1"].astype(jnp.float32)
    h1 = jnp.maximum(h1, 0.0).astype(bf)
    h2 = jnp.dot(h1, p["W2"].astype(bf),
                 preferred_element_type=jnp.float32) + p["b2"].astype(jnp.float32)
    h2 = jnp.maximum(h2, 0.0).astype(bf)
    return jnp.dot(h2, p["W3"].astype(bf),
                   preferred_element_type=jnp.float32) + p["b3"].astype(jnp.float32)


if __name__ == "__main__":
    key = jax.random.PRNGKey(0)
    kp, kx_small, kx_big = jax.random.split(key, 3)

    n_state, n_action = 8, 4  # small DQN-style shapes (e.g. LunarLander-ish)
    params = init_params(kp, n_state, n_action)

    # Case 1: tiny batch. Case 2: replay-style batch. Both are single-grid-step
    # now (step-overhead bound); the multi-step path engages only for B > 1024.
    for B, kx in ((8, kx_small), (256, kx_big)):
        x = jax.random.normal(kx, (B, n_state), jnp.float32)

        q, act = dnn_forward(x, params)
        q = jax.block_until_ready(q)
        act = jax.block_until_ready(act)

        ref = dnn_reference_bf16(x, params)
        assert q.shape == (B, n_action)
        assert act.shape == (B,)
        assert jnp.allclose(q, ref, atol=1e-2, rtol=1e-2), \
            f"Q-value mismatch vs reference at B={B}"
        assert jnp.array_equal(
            act, jnp.argmax(q, axis=-1).astype(jnp.int32)
        ), f"fused argmax mismatch at B={B}"

    print("KERNEL_OK")
</pallas_src>

<mosaic_0001>
module attributes {stable_mosaic.version = 11 : i64} {
  func.func @dnn_kernel(%arg0: i32, %arg1: memref<8x8xf32, #tpu.memory_space<vmem>>, %arg2: memref<8x64xbf16, #tpu.memory_space<vmem>>, %arg3: memref<1x64xf32, #tpu.memory_space<vmem>>, %arg4: memref<64x64xbf16, #tpu.memory_space<vmem>>, %arg5: memref<1x64xf32, #tpu.memory_space<vmem>>, %arg6: memref<64x4xbf16, #tpu.memory_space<vmem>>, %arg7: memref<1x4xf32, #tpu.memory_space<vmem>>, %arg8: memref<8x4xf32, #tpu.memory_space<vmem>>, %arg9: memref<1x8xi32, #tpu.memory_space<vmem>>) attributes {dimension_semantics = [#tpu.dimension_semantics<parallel>], iteration_bounds = array<i64: 1>, scalar_prefetch = 0 : i64, scratch_operands = 0 : i64, tpu.core_type = #tpu.core_type<tc>, window_params = [{transform_indices = @transform_0, window_bounds = array<i64: 8, 8>}, {pipeline_mode = #tpu.pipeline_mode<synchronous>, transform_indices = @transform_1, window_bounds = array<i64: 8, 64>}, {pipeline_mode = #tpu.pipeline_mode<synchronous>, transform_indices = @transform_2, window_bounds = array<i64: 1, 64>}, {pipeline_mode = #tpu.pipeline_mode<synchronous>, transform_indices = @transform_3, window_bounds = array<i64: 64, 64>}, {pipeline_mode = #tpu.pipeline_mode<synchronous>, transform_indices = @transform_4, window_bounds = array<i64: 1, 64>}, {pipeline_mode = #tpu.pipeline_mode<synchronous>, transform_indices = @transform_5, window_bounds = array<i64: 64, 4>}, {pipeline_mode = #tpu.pipeline_mode<synchronous>, transform_indices = @transform_6, window_bounds = array<i64: 1, 4>}, {transform_indices = @transform_7, window_bounds = array<i64: 8, 4>}, {transform_indices = @transform_8, window_bounds = array<i64: 1, 8>}]} {
    %c0 = arith.constant 0 : index
    %c0_0 = arith.constant 0 : index
    %0 = vector.load %arg1[%c0, %c0_0] : memref<8x8xf32, #tpu.memory_space<vmem>>, vector<8x8xf32>
    %1 = arith.truncf %0 : vector<8x8xf32> to vector<8x8xbf16>
    %c0_1 = arith.constant 0 : index
    %c0_2 = arith.constant 0 : index
    %2 = vector.load %arg2[%c0_1, %c0_2] : memref<8x64xbf16, #tpu.memory_space<vmem>>, vector<8x64xbf16>
    %cst = arith.constant dense<0.000000e+00> : vector<8x64xf32>
    %3 = tpu.matmul %1, %2, %cst {dimension_numbers = #tpu.dot_dimension_numbers<[1], [0], [0], [1], [0, 0, 1, 1], [], []>} : vector<8x8xbf16>, vector<8x64xbf16>, vector<8x64xf32> -> vector<8x64xf32>
    %c0_3 = arith.constant 0 : index
    %c0_4 = arith.constant 0 : index
    %4 = vector.load %arg3[%c0_3, %c0_4] : memref<1x64xf32, #tpu.memory_space<vmem>>, vector<1x64xf32>
    %5 = vector.broadcast %4 : vector<1x64xf32> to vector<8x64xf32>
    %6 = arith.addf %3, %5 : vector<8x64xf32>
    %cst_5 = arith.constant 0.000000e+00 : f32
    %7 = vector.broadcast %cst_5 : f32 to vector<8x64xf32>
    %8 = arith.maximumf %6, %7 : vector<8x64xf32>
    %9 = arith.truncf %8 : vector<8x64xf32> to vector<8x64xbf16>
    %c0_6 = arith.constant 0 : index
    %c0_7 = arith.constant 0 : index
    %10 = vector.load %arg4[%c0_6, %c0_7] : memref<64x64xbf16, #tpu.memory_space<vmem>>, vector<64x64xbf16>
    %cst_8 = arith.constant dense<0.000000e+00> : vector<8x64xf32>
    %11 = tpu.matmul %9, %10, %cst_8 {dimension_numbers = #tpu.dot_dimension_numbers<[1], [0], [0], [1], [0, 0, 1, 1], [], []>} : vector<8x64xbf16>, vector<64x64xbf16>, vector<8x64xf32> -> vector<8x64xf32>
    %c0_9 = arith.constant 0 : index
    %c0_10 = arith.constant 0 : index
    %12 = vector.load %arg5[%c0_9, %c0_10] : memref<1x64xf32, #tpu.memory_space<vmem>>, vector<1x64xf32>
    %13 = vector.broadcast %12 : vector<1x64xf32> to vector<8x64xf32>
    %14 = arith.addf %11, %13 : vector<8x64xf32>
    %cst_11 = arith.constant 0.000000e+00 : f32
    %15 = vector.broadcast %cst_11 : f32 to vector<8x64xf32>
    %16 = arith.maximumf %14, %15 : vector<8x64xf32>
    %17 = arith.truncf %16 : vector<8x64xf32> to vector<8x64xbf16>
    %c0_12 = arith.constant 0 : index
    %c0_13 = arith.constant 0 : index
    %18 = vector.load %arg6[%c0_12, %c0_13] : memref<64x4xbf16, #tpu.memory_space<vmem>>, vector<64x4xbf16>
    %cst_14 = arith.constant dense<0.000000e+00> : vector<8x4xf32>
    %19 = tpu.matmul %17, %18, %cst_14 {dimension_numbers = #tpu.dot_dimension_numbers<[1], [0], [0], [1], [0, 0, 1, 1], [], []>} : vector<8x64xbf16>, vector<64x4xbf16>, vector<8x4xf32> -> vector<8x4xf32>
    %c0_15 = arith.constant 0 : index
    %c0_16 = arith.constant 0 : index
    %20 = vector.load %arg7[%c0_15, %c0_16] : memref<1x4xf32, #tpu.memory_space<vmem>>, vector<1x4xf32>
    %21 = vector.broadcast %20 : vector<1x4xf32> to vector<8x4xf32>
    %22 = arith.addf %19, %21 : vector<8x4xf32>
    %c0_17 = arith.constant 0 : index
    %c0_18 = arith.constant 0 : index
    %23 = vector.load %arg8[%c0_17, %c0_18] : memref<8x4xf32, #tpu.memory_space<vmem>>, vector<8x4xf32>
    tpu.vector_store %arg8[%c0_17, %c0_18], %22 {strides = array<i32>} : memref<8x4xf32, #tpu.memory_space<vmem>>, vector<8x4xf32>,
    %24 = tpu.iota {dimensions = array<i32: 1>} : vector<8x4xi32>
    %cst_19 = arith.constant dense<0xFF800000> : vector<8xf32>
    %25 = vector.multi_reduction <maximumf>, %22, %cst_19 [1] : vector<8x4xf32> to vector<8xf32>
    %26 = vector.shape_cast %25 : vector<8xf32> to vector<8x1xf32>
    %27 = vector.broadcast %26 : vector<8x1xf32> to vector<8x4xf32>
    %28 = arith.cmpf oeq, %22, %27 : vector<8x4xf32>
    %c4_i32 = arith.constant 4 : i32
    %29 = vector.broadcast %c4_i32 : i32 to vector<8x4xi32>
    %30 = arith.select %28, %24, %29 : vector<8x4xi1>, vector<8x4xi32>
    %cst_20 = arith.constant dense<2147483647> : vector<8xi32>
    %31 = vector.multi_reduction <minsi>, %30, %cst_20 [1] : vector<8x4xi32> to vector<8xi32>
    %32 = vector.shape_cast %31 : vector<8xi32> to vector<8x1xi32>
    %33 = tpu.transpose %32, [1, 0] : vector<8x1xi32> -> vector<1x8xi32>
    %c0_21 = arith.constant 0 : index
    %c0_22 = arith.constant 0 : index
    %34 = vector.load %arg9[%c0_21, %c0_22] : memref<1x8xi32, #tpu.memory_space<vmem>>, vector<1x8xi32>
    tpu.vector_store %arg9[%c0_21, %c0_22], %33 {strides = array<i32>} : memref<1x8xi32, #tpu.memory_space<vmem>>, vector<1x8xi32>,
    return
  }
  func.func @transform_0(%arg0: i32) -> (i32, i32) {
    %c0_i32 = arith.constant 0 : i32
    %c0_i32_0 = arith.constant 0 : i32
    return %arg0, %c0_i32 : i32, i32
  }
  func.func @transform_1(%arg0: i32) -> (i32, i32) {
    %c0_i32 = arith.constant 0 : i32
    %c0_i32_0 = arith.constant 0 : i32
    %c0_i32_1 = arith.constant 0 : i32
    return %c0_i32, %c0_i32_0 : i32, i32
  }
  func.func @transform_2(%arg0: i32) -> (i32, i32) {
    %c0_i32 = arith.constant 0 : i32
    %c0_i32_0 = arith.constant 0 : i32
    %c0_i32_1 = arith.constant 0 : i32
    return %c0_i32, %c0_i32_0 : i32, i32
  }
  func.func @transform_3(%arg0: i32) -> (i32, i32) {
    %c0_i32 = arith.constant 0 : i32
    %c0_i32_0 = arith.constant 0 : i32
    %c0_i32_1 = arith.constant 0 : i32
    return %c0_i32, %c0_i32_0 : i32, i32
  }
  func.func @transform_4(%arg0: i32) -> (i32, i32) {
    %c0_i32 = arith.constant 0 : i32
    %c0_i32_0 = arith.constant 0 : i32
    %c0_i32_1 = arith.constant 0 : i32
    return %c0_i32, %c0_i32_0 : i32, i32
  }
  func.func @transform_5(%arg0: i32) -> (i32, i32) {
    %c0_i32 = arith.constant 0 : i32
    %c0_i32_0 = arith.constant 0 : i32
    %c0_i32_1 = arith.constant 0 : i32
    return %c0_i32, %c0_i32_0 : i32, i32
  }
  func.func @transform_6(%arg0: i32) -> (i32, i32) {
    %c0_i32 = arith.constant 0 : i32
    %c0_i32_0 = arith.constant 0 : i32
    %c0_i32_1 = arith.constant 0 : i32
    return %c0_i32, %c0_i32_0 : i32, i32
  }
  func.func @transform_7(%arg0: i32) -> (i32, i32) {
    %c0_i32 = arith.constant 0 : i32
    %c0_i32_0 = arith.constant 0 : i32
    return %arg0, %c0_i32 : i32, i32
  }
  func.func @transform_8(%arg0: i32) -> (i32, i32) {
    %c0_i32 = arith.constant 0 : i32
    %c0_i32_0 = arith.constant 0 : i32
    return %c0_i32, %arg0 : i32, i32
  }
}

</mosaic_0001>

<llo_original>
// kernel: tpu_custom_call.1
$region0: #{tpu_custom_call.1}
  #allocation0 [shape = 'u32[]', space=smem, size = 0x4, offset = 0x4, fixed_abs, tag = 'smem constant byte address 0x4 - core index']
  #allocation1 [shape = 'u32[72,128]{1,0:T(1,128)}', space=vmem, size = 0x9000, scoped, tag = 'internal scratch']
  %s0 = inlined_call_operand.hbm [shape: f32[8,8], index: 0, kind: input, shape index: {}]
  %s1 = inlined_call_operand.hbm [shape: bf16[8,64], index: 1, kind: input, shape index: {}]
  %s2 = inlined_call_operand.vmem [shape: f32[1,64], index: 2, kind: input, shape index: {}]
  %s3 = inlined_call_operand.vmem [shape: bf16[64,64], index: 3, kind: input, shape index: {}]
  %s4 = inlined_call_operand.vmem [shape: f32[1,64], index: 4, kind: input, shape index: {}]
  %s5 = inlined_call_operand.vmem [shape: bf16[64,4], index: 5, kind: input, shape index: {}]
  %s6 = inlined_call_operand.vmem [shape: f32[1,4], index: 6, kind: input, shape index: {}]
  %s7 = inlined_call_operand.vmem [shape: f32[8,4], index: 7, kind: output, shape index: {0}]
  %s8 = inlined_call_operand.hbm [shape: s32[1,8], index: 8, kind: output, shape index: {1}]
  %9 = xla_tuple %s7, %s8
  %s10 = sld [smem:[#allocation0]]
  $region54: #{tpu_custom_call.1} parent=0
    _
  %s12 = ssub.s32 1, %s10
  %s13 = scalar_select 0, %s12, %s10
  $region1: #{tpu_custom_call.1} parent=0
    #allocation2 [shape = 'u8[4096]{0}', space=vmem, size = 0x1000, scoped, tag = 'input window, operand 0, single buffered']
    #allocation3 [shape = 's32[1]{0}', space=sflag, size = 0x4, scoped, tag = 'scoped memory for tpu_custom_call.1']
    #allocation4 [shape = 's32[1]{0}', space=sflag, size = 0x4, scoped, tag = 'scoped memory for tpu_custom_call.1']
    #allocation5 [shape = 'u8[2048]{0}', space=vmem, size = 0x800, scoped, tag = 'input window, operand 1, single buffered']
    #allocation6 [shape = 's32[1]{0}', space=sflag, size = 0x4, scoped, tag = 'scoped memory for tpu_custom_call.1']
    #allocation7 [shape = 'u8[512]{0}', space=vmem, size = 0x400, scoped, tag = 'output window, operand 1, single buffered']
    %14 = vsyncpa [#allocation3], 0
    %15 = vsyncpa [#allocation6], 0
    %16 = vsyncpa [#allocation4], 0
    // Predicated region
    $region2: #{tpu_custom_call.1} parent=1 // pred_check
      _
    $region3: #{tpu_custom_call.1} parent=1 // pred_check_branch
      %18 = sbr.rel (0) target = $region5
    $region4: #{tpu_custom_call.1} parent=1 // pred_region
      %20 = vsyncadd [#allocation3], 0
      %s22 = sshll.u32 %s0, 4
      %s23 = int_to_ptr.hbm [resolvable:$true] %s22
      %s24 = sshll.u32 [#allocation2], 4
      %s25 = int_to_ptr.vmem [resolvable:$true] %s24
      %27 = dma.hbm_to_vmem [thread:$0]  %s23, 128, %s25, [#allocation3]
    $region5: #{tpu_custom_call.1} parent=1 // pred_fallthru
      _
    // Predicated region
    $region6: #{tpu_custom_call.1} parent=1 // pred_check
      _
    $region7: #{tpu_custom_call.1} parent=1 // pred_check_branch
      %29 = sbr.rel (0) target = $region9
    $region8: #{tpu_custom_call.1} parent=1 // pred_region
      %31 = vsyncadd [#allocation6], 0
      %s33 = sshll.u32 %s1, 4
      %s34 = int_to_ptr.hbm [resolvable:$true] %s33
      %s35 = sshll.u32 [#allocation5], 4
      %s36 = int_to_ptr.vmem [resolvable:$true] %s35
      %38 = dma.hbm_to_vmem [thread:$0]  %s34, 64, %s36, [#allocation6]
    $region9: #{tpu_custom_call.1} parent=1 // pred_fallthru
      _
    // Predicated region
    $region10: #{tpu_custom_call.1} parent=1 // pred_check
      _
    $region11: #{tpu_custom_call.1} parent=1 // pred_check_branch
      %40 = sbr.rel (0) target = $region13
    $region12: #{tpu_custom_call.1} parent=1 // pred_region
      _
    $region13: #{tpu_custom_call.1} parent=1 // pred_fallthru
      _
    // Predicated region
    $region14: #{tpu_custom_call.1} parent=1 // pred_check
      _
    $region15: #{tpu_custom_call.1} parent=1 // pred_check_branch
      %42 = sbr.rel (0) target = $region17
    $region16: #{tpu_custom_call.1} parent=1 // pred_region
      _
    $region17: #{tpu_custom_call.1} parent=1 // pred_fallthru
      _
    // Predicated region
    $region18: #{tpu_custom_call.1} parent=1 // pred_check
      _
    $region19: #{tpu_custom_call.1} parent=1 // pred_check_branch
      %44 = sbr.rel (0) target = $region21
    $region20: #{tpu_custom_call.1} parent=1 // pred_region
      _
    $region21: #{tpu_custom_call.1} parent=1 // pred_fallthru
      _
    // Predicated region
    $region22: #{tpu_custom_call.1} parent=1 // pred_check
      _
    $region23: #{tpu_custom_call.1} parent=1 // pred_check_branch
      %46 = sbr.rel (0) target = $region25
    $region24: #{tpu_custom_call.1} parent=1 // pred_region
      _
    $region25: #{tpu_custom_call.1} parent=1 // pred_fallthru
      _
    // Predicated region
    $region26: #{tpu_custom_call.1} parent=1 // pred_check
      _
    $region27: #{tpu_custom_call.1} parent=1 // pred_check_branch
      %48 = sbr.rel (0) target = $region29
    $region28: #{tpu_custom_call.1} parent=1 // pred_region
      _
    $region29: #{tpu_custom_call.1} parent=1 // pred_fallthru
      _
    // Predicated region
    $region30: #{tpu_custom_call.1} parent=1 // pred_check
      _
    $region31: #{tpu_custom_call.1} parent=1 // pred_check_branch
      %50 = sbr.rel (0) target = $region33
    $region32: #{tpu_custom_call.1} parent=1 // pred_region
      %52 = dma.done [#allocation3], 128
    $region33: #{tpu_custom_call.1} parent=1 // pred_fallthru
      _
    // Predicated region
    $region34: #{tpu_custom_call.1} parent=1 // pred_check
      _
    $region35: #{tpu_custom_call.1} parent=1 // pred_check_branch
      %54 = sbr.rel (0) target = $region37
    $region36: #{tpu_custom_call.1} parent=1 // pred_region
      %56 = dma.done [#allocation6], 64
    $region37: #{tpu_custom_call.1} parent=1 // pred_fallthru
      _
    %v58 = vld [vmem:[#allocation2] sm:$0xff]
    %v59 = vpack.c.bf16 %v58, %v58
    %v60 = vld [vmem:[#allocation5] sm:$0xf]
    %v61 = vld [vmem:[%s2] sm:$0x1]
    %v63 = vperm.slane %v61, 0
    %vm65 = vcmask 64512
    %v67 = vsel %vm65, %v59, 0
    %vm69 = vcmask 1043456
    %v71 = vsel %vm69, %v60, 0
    %73 = vmatpush.bf16.msra.mxu0 0
    %74 = vmatpush.bf16.msra.mxu0 0
    %75 = vmatpush.bf16.msra.mxu0 0
    %76 = vmatpush.bf16.msra.mxu0 0
    %77 = vmatpush.bf16.msra.mxu0 0
    %78 = vmatpush.bf16.msra.mxu0 0
    %79 = vmatpush.bf16.msra.mxu0 0
    %80 = vmatpush.bf16.msra.mxu0 %v71
    %81 = vmatmul.bf16.gmra.mxu0 %v67
    %v82 = vpop.f32.mrf.mxu0
    %v83 = vadd.f32 %v63, %v82
    %v84 = vpop.f32.mrf.mxu0
    %85 = vdwg.mxu0
    %v86 = vmax.f32 %v83, 0.0
    %v87 = vpack.c.bf16 %v86, %v86
    %v88 = vld [vmem:[%s3] sm:$0xf]
    %v89 = vld [vmem:[%s3 + $0x4] sm:$0xf]
    %v90 = vld [vmem:[%s3 + $0x8] sm:$0xf]
    %v91 = vld [vmem:[%s3 + $0xc] sm:$0xf]
    %v92 = vld [vmem:[%s3 + $0x10] sm:$0xf]
    %v93 = vld [vmem:[%s3 + $0x14] sm:$0xf]
    %v94 = vld [vmem:[%s3 + $0x18] sm:$0xf]
    %v95 = vld [vmem:[%s3 + $0x1c] sm:$0xf]
    %v96 = vld [vmem:[%s4] sm:$0x1]
    %v98 = vperm.slane %v96, 0
    %v108 = vunpack.c.l.b16 %v88
    %v109 = vunpack.c.l.b16 %v89
    %v110 = vunpack.c.l.b16 %v90
    %v111 = vunpack.c.l.b16 %v91
    %v112 = vunpack.c.l.b16 %v92
    %v113 = vunpack.c.l.b16 %v93
    %v114 = vunpack.c.l.b16 %v94
    %v115 = vunpack.c.l.b16 %v95
    %v116 = vpack.c.b16 %v109, %v108
    %v117 = vpack.c.b16 %v111, %v110
    %v118 = vpack.c.b16 %v113, %v112
    %v119 = vpack.c.b16 %v115, %v114
    %vm124 = vcmask 523264
    %v126 = vsel %vm124, %v87, 0
    %128 = vmatpush.bf16.msra.mxu0 0
    %129 = vmatpush.bf16.msra.mxu0 0
    %130 = vmatpush.bf16.msra.mxu0 0
    %131 = vmatpush.bf16.msra.mxu0 0
    %132 = vmatpush.bf16.msra.mxu0 %v119
    %133 = vmatpush.bf16.msra.mxu0 %v118
    %134 = vmatpush.bf16.msra.mxu0 %v117
    %135 = vmatpush.bf16.msra.mxu0 %v116
    %136 = vmatmul.bf16.gmra.mxu0 %v126
    %v137 = vpop.f32.mrf.mxu0
    %v138 = vadd.f32 %v98, %v137
    %v139 = vpop.f32.mrf.mxu0
    %140 = vdwg.mxu0
    %v141 = vmax.f32 %v138, 0.0
    %v142 = vpack.c.bf16 %v141, %v141
    %v143 = vld [vmem:[%s5] sm:$0xf]
    %v144 = vld [vmem:[%s5 + $0x4] sm:$0xf]
    %v145 = vld [vmem:[%s5 + $0x8] sm:$0xf]
    %v146 = vld [vmem:[%s5 + $0xc] sm:$0xf]
    %v147 = vld [vmem:[%s5 + $0x10] sm:$0xf]
    %v148 = vld [vmem:[%s5 + $0x14] sm:$0xf]
    %v149 = vld [vmem:[%s5 + $0x18] sm:$0xf]
    %v150 = vld [vmem:[%s5 + $0x1c] sm:$0xf]
    %v151 = vld [vmem:[%s6] sm:$0x1]
    %v153 = vperm.slane %v151, 0
    %v163 = vunpack.c.l.b16 %v143
    %v164 = vunpack.c.l.b16 %v144
    %v165 = vunpack.c.l.b16 %v145
    %v166 = vunpack.c.l.b16 %v146
    %v167 = vunpack.c.l.b16 %v147
    %v168 = vunpack.c.l.b16 %v148
    %v169 = vunpack.c.l.b16 %v149
    %v170 = vunpack.c.l.b16 %v150
    %v171 = vpack.c.b16 %v164, %v163
    %v172 = vpack.c.b16 %v166, %v165
    %v173 = vpack.c.b16 %v168, %v167
    %v174 = vpack.c.b16 %v170, %v169
    %v180 = vsel %vm124, %v142, 0
    %182 = vmatpush.bf16.msra.mxu0 0
    %183 = vmatpush.bf16.msra.mxu0 0
    %184 = vmatpush.bf16.msra.mxu0 0
    %185 = vmatpush.bf16.msra.mxu0 0
    %186 = vmatpush.bf16.msra.mxu0 %v174
    %187 = vmatpush.bf16.msra.mxu0 %v173
    %188 = vmatpush.bf16.msra.mxu0 %v172
    %189 = vmatpush.bf16.msra.mxu0 %v171
    %190 = vmatmul.bf16.gmra.mxu0 %v180
    %v191 = vpop.f32.mrf.mxu0
    %v192 = vadd.f32 %v153, %v191
    %v193 = vpop.f32.mrf.mxu0
    %194 = vdwg.mxu0
    %vm195 = vcmask 31744
    %196 = vst.msk [vmem:[%s7] sm:$0xff] %vm195, %v192
    %v197 = vlaneseq
    %v198 = vand.u32 %v197, 127
    %v199 = vsel %vm195, %v192, -inf
    %200 = vmax.xlane.f32.xlu0 %v199
    %v201 = vpop.xlane.xlu0 %200
    %vm202 = vcmp.eq.f32.partialorder %v192, %v201
    %v203 = vsel %vm202, %v198, 4
    %v204 = vsel %vm195, %v203, 2147483647
    %v205 = vand.u32 %v204, 65535
    %v206 = vshra.s32 %v204, 16
    %v207 = vcvt.s32.f32 %v205
    %v208 = vcvt.s32.f32 %v206
    %209 = vmin.xlane.f32.xlu0 %v208
    %v210 = vpop.xlane.xlu0 %209
    %vm211 = vcmp.eq.f32.partialorder %v208, %v210
    %v212 = vsel %vm211, %v207, inf
    %213 = vmin.xlane.f32.xlu0 %v212
    %v214 = vpop.xlane.xlu0 %213
    %v215 = vcvt.f32.s32 %v214
    %v216 = vcvt.f32.s32 %v210
    %v217 = vshll.u32 %v216, 16
    %v218 = vadd.s32 %v217, %v215
    %219 = vxpose.xlu0.b32.start [1/16] %v218, 128
    %220 = vxpose.xlu0.b32.cont [2/16] 0, 128
    %221 = vxpose.xlu0.b32.cont [3/16] 0, 128
    %222 = vxpose.xlu0.b32.cont [4/16] 0, 128
    %223 = vxpose.xlu0.b32.cont [5/16] 0, 128
    %224 = vxpose.xlu0.b32.cont [6/16] 0, 128
    %225 = vxpose.xlu0.b32.cont [7/16] 0, 128
    %226 = vxpose.xlu0.b32.cont [8/16] 0, 128
    %227 = vxpose.xlu0.b32.cont [9/16] 0, 128
    %228 = vxpose.xlu0.b32.cont [10/16] 0, 128
    %229 = vxpose.xlu0.b32.cont [11/16] 0, 128
    %230 = vxpose.xlu0.b32.cont [12/16] 0, 128
    %231 = vxpose.xlu0.b32.cont [13/16] 0, 128
    %232 = vxpose.xlu0.b32.cont [14/16] 0, 128
    %233 = vxpose.xlu0.b32.cont [15/16] 0, 128
    %234 = vxpose.xlu0.b32.end [16/16] 0, 128
    %v235 = vpop.trf.xlu0
    %v236 = vpop.trf.xlu0
    %v237 = vpop.trf.xlu0
    %v238 = vpop.trf.xlu0
    %v239 = vpop.trf.xlu0
    %v240 = vpop.trf.xlu0
    %v241 = vpop.trf.xlu0
    %v242 = vpop.trf.xlu0
    %v243 = vpop.trf.xlu0
    %v244 = vpop.trf.xlu0
    %v245 = vpop.trf.xlu0
    %v246 = vpop.trf.xlu0
    %v247 = vpop.trf.xlu0
    %v248 = vpop.trf.xlu0
    %v249 = vpop.trf.xlu0
    %v250 = vpop.trf.xlu0
    %vm251 = vcmask 57344
    %252 = vst.msk [vmem:[#allocation7] sm:$0x1] %vm251, %v235
    // Predicated region
    $region38: #{tpu_custom_call.1} parent=1 // pred_check
      _
    $region39: #{tpu_custom_call.1} parent=1 // pred_check_branch
      %254 = sbr.rel (0) target = $region41
    $region40: #{tpu_custom_call.1} parent=1 // pred_region
      _
    $region41: #{tpu_custom_call.1} parent=1 // pred_fallthru
      _
    // Predicated region
    $region42: #{tpu_custom_call.1} parent=1 // pred_check
      _
    $region43: #{tpu_custom_call.1} parent=1 // pred_check_branch
      %256 = sbr.rel (0) target = $region45
    $region44: #{tpu_custom_call.1} parent=1 // pred_region
      %258 = vsyncadd [#allocation4], 0
      %s260 = sshll.u32 [#allocation7], 4
      %s261 = int_to_ptr.vmem [resolvable:$true] %s260
      %s262 = sshll.u32 %s8, 4
      %s263 = int_to_ptr.hbm [resolvable:$true] %s262
      %265 = dma.vmem_to_hbm [thread:$0]  %s261, 16, %s263, [#allocation4]
    $region45: #{tpu_custom_call.1} parent=1 // pred_fallthru
      _
    // Predicated region
    $region46: #{tpu_custom_call.1} parent=1 // pred_check
      _
    $region47: #{tpu_custom_call.1} parent=1 // pred_check_branch
      %267 = sbr.rel (0) target = $region49
    $region48: #{tpu_custom_call.1} parent=1 // pred_region
      _
    $region49: #{tpu_custom_call.1} parent=1 // pred_fallthru
      _
    // Predicated region
    $region50: #{tpu_custom_call.1} parent=1 // pred_check
      _
    $region51: #{tpu_custom_call.1} parent=1 // pred_check_branch
      %269 = sbr.rel (0) target = $region53
    $region52: #{tpu_custom_call.1} parent=1 // pred_region
      %271 = dma.done [#allocation4], 16
    $region53: #{tpu_custom_call.1} parent=1 // pred_fallthru
      _
    %272 = vsyncpa [#allocation3], 1
    %273 = vsyncpa [#allocation6], 1
    %274 = vsyncpa [#allocation4], 1

</llo_original>
